<compile_context>
chip_gen: v5e
topology: v5e:2x2
jax: 0.10.0
libtpu: 0.0.40
codegen_flags: <defaults>
</compile_context>

<pallas_src>
import jax
import jax.numpy as jnp
from jax.experimental import pallas as pl
from jax.experimental.pallas import tpu as pltpu


def _round8(n):
    return (n + 7) // 8 * 8


# ---- packed-parameter layout (static trace-time constants) -----------------
# Weight slab: rows 8-aligned per entry, 64 lanes wide (max out-dim is 64).
_W_SHAPE = {
    "conv1": (36, 32),    # (kh*kw*Cin, Cout), rows ordered (ki, kj, ci)
    "conv2": (288, 64),   # (kh*kw*Cin, Cout), rows ordered (ki, kj, ci)
    "fc1a":  (64, 16),
    "fc1b":  (16, 4),
    "fc2a":  (4, 8),
    "fc2b":  (8, 4),
    "sfc1a": (4, 16),     # sfc1 weight rows 0:4 (fc1-branch half of the concat)
    "sfc1b": (4, 16),     # sfc1 weight rows 4:8 (fc2-branch half)
    "sfc2":  (16, 16),
    "sfc3":  (16, 1),
}
_W_OFF = {}
_off = 0
for _n, (_r, _c) in _W_SHAPE.items():
    _W_OFF[_n] = _off
    _off += _round8(_r)
_W_ROWS, _W_COLS = _off, 64                 # (472, 64)

# Bias slab: one bias vector per row, 64 lanes wide.
_B_SIZE = {"conv1": 32, "conv2": 64, "fc1a": 16, "fc1b": 4,
           "fc2a": 8, "fc2b": 4, "sfc1": 16, "sfc2": 16, "sfc3": 1}
_B_ROW = {n: i for i, n in enumerate(_B_SIZE)}
_B_ROWS, _B_COLS = _round8(len(_B_SIZE)), 64   # (16, 64)


def _fused_forward_kernel(x1_ref, x2_ref, w_ref, b_ref, out_ref):
    """x1_ref: (64B, 36) conv1 im2col slab, rows (pp, oih, ojh, b);
    x2_ref: (B, 4); w_ref: (472, 64) packed weights; b_ref: (16, 64) packed
    biases; out_ref: (B, 1)."""
    f32 = jnp.float32
    B = x2_ref.shape[0]

    def w(name):
        off, (r, c) = _W_OFF[name], _W_SHAPE[name]
        return w_ref[off:off + r, :c]

    def b(name):
        row, n = _B_ROW[name], _B_SIZE[name]
        return b_ref[row:row + 1, :n]

    def silu(v):
        return v * jax.nn.sigmoid(v)

    def dense(v, name, act):
        r = jnp.dot(v, w(name), preferred_element_type=f32) + b(name)
        return silu(r) if act else r

    # ---- conv1 (3x3, 4->32) as ONE im2col matmul; Dropout=id; SiLU --------
    a1 = dense(x1_ref[...], "conv1", act=True)                    # (64B, 32)

    # ---- MaxPool2d(2): rows are (pool-parity, oih, ojh, b), so the pool is
    # an elementwise max of the four contiguous row-quarters (pure vreg maxes).
    q = 16 * B
    p1 = jnp.maximum(jnp.maximum(a1[0 * q:1 * q], a1[1 * q:2 * q]),
                     jnp.maximum(a1[2 * q:3 * q], a1[3 * q:4 * q]))  # (16B, 32)

    # ---- conv2 (3x3, 32->64) as ONE matmul over all 4 output positions ----
    # p1 rows are (oih, ojh, b): for kernel offset (ki, kj), the four output
    # positions' inputs are two contiguous row runs of length 2B each.
    def block(ki, kj):
        top = p1[(ki * 4 + kj) * B:(ki * 4 + kj + 2) * B]              # oih = ki
        bot = p1[((ki + 1) * 4 + kj) * B:((ki + 1) * 4 + kj + 2) * B]  # oih = ki+1
        return jnp.concatenate([top, bot], axis=0)                     # (4B, 32)

    slab2 = jnp.concatenate(
        [block(ki, kj) for ki in range(3) for kj in range(3)], axis=1)  # (4B, 288)
    a2 = dense(slab2, "conv2", act=True)                                # (4B, 64)

    # conv2 output map is 2x2, so MaxPool2d(2) == max over the 4 positions
    # (again four contiguous row quarters). Flatten(64) is then a no-op.
    pooled = jnp.maximum(jnp.maximum(a2[0 * B:1 * B], a2[1 * B:2 * B]),
                         jnp.maximum(a2[2 * B:3 * B], a2[3 * B:4 * B]))  # (B, 64)

    # ---- fc1 tail: Linear(64,16)+SiLU -> Linear(16,4) ---------------------
    t1 = dense(dense(pooled, "fc1a", act=True), "fc1b", act=False)       # (B, 4)
    # ---- fc2 branch: Linear(4,8)+SiLU -> Linear(8,4) ----------------------
    t2 = dense(dense(x2_ref[...], "fc2a", act=True), "fc2b", act=False)  # (B, 4)

    # ---- sfc head; cat([t1, t2], 1) @ W == t1 @ W[:4] + t2 @ W[4:] --------
    h = silu(jnp.dot(t1, w("sfc1a"), preferred_element_type=f32)
             + jnp.dot(t2, w("sfc1b"), preferred_element_type=f32)
             + b("sfc1"))                                                # (B, 16)
    h = dense(h, "sfc2", act=True)                                       # (B, 16)
    o = dense(h, "sfc3", act=False)                                      # (B, 1)
    out_ref[...] = o.astype(out_ref.dtype)


def _pack_params(p):
    """Pack all weights into one (472, 64) slab and all biases into (16, 64)."""
    w_slab = jnp.zeros((_W_ROWS, _W_COLS), jnp.float32)
    for name, (r, c) in _W_SHAPE.items():
        if name == "sfc1a":
            mat = p["sfc1_w"][:4]
        elif name == "sfc1b":
            mat = p["sfc1_w"][4:]
        else:
            mat = p[name + "_w"]
        w_slab = w_slab.at[_W_OFF[name]:_W_OFF[name] + r, :c].set(
            mat.astype(jnp.float32))
    b_slab = jnp.zeros((_B_ROWS, _B_COLS), jnp.float32)
    for name, n in _B_SIZE.items():
        b_slab = b_slab.at[_B_ROW[name], :n].set(
            p[name + "_b"].astype(jnp.float32))
    return w_slab, b_slab


def _conv1_im2col(tensor1):
    """(B, 4, 10, 10) NCHW -> (64B, 36) slab.

    Rows ordered (pp = (oi%2)*2 + oj%2, oih = oi//2, ojh = oj//2, b); columns
    ordered (ki, kj, ci) to match the conv1 weight layout."""
    B = tensor1.shape[0]
    x = jnp.transpose(tensor1.astype(jnp.float32), (0, 2, 3, 1))      # (B,10,10,4)
    wins = [x[:, ki:ki + 8, kj:kj + 8, :] for ki in range(3) for kj in range(3)]
    p = jnp.stack(wins, axis=3)                                       # (B,8,8,9,4)
    p = p.reshape(B, 4, 2, 4, 2, 36)                                  # (b,oih,oip,ojh,ojp,f)
    p = jnp.transpose(p, (2, 4, 1, 3, 0, 5))                          # (oip,ojp,oih,ojh,b,f)
    return p.reshape(64 * B, 36)


def ny_network_forward(params, tensor1, tensor2):
    """tensor1: (B, 4, 10, 10) NCHW, tensor2: (B, 4) -> (B, 1)."""
    B = tensor1.shape[0]
    slab1 = _conv1_im2col(tensor1)
    x2 = tensor2.astype(jnp.float32)
    w_slab, b_slab = _pack_params(params)

    vmem = pl.BlockSpec(memory_space=pltpu.MemorySpace.VMEM)
    return pl.pallas_call(
        _fused_forward_kernel,
        out_shape=jax.ShapeDtypeStruct((B, 1), jnp.float32),
        in_specs=[vmem, vmem, vmem, vmem],
        out_specs=vmem,
    )(slab1, x2, w_slab, b_slab)


def init_params(key):
    """PyTorch-style U(-1/sqrt(fan_in), 1/sqrt(fan_in)) init.

    Conv weights stored as (kh*kw*Cin, Cout) == torch (Cout,Cin,kh,kw)
    .permute(2,3,1,0).reshape(-1, Cout); linear weights as (in, out) ==
    torch (out, in).T; biases as flat (n,)."""
    def uni(k, shape, fan_in):
        bound = 1.0 / float(fan_in) ** 0.5
        return jax.random.uniform(k, shape, jnp.float32, -bound, bound)

    ks = jax.random.split(key, 18)
    return {
        "conv1_w": uni(ks[0], (36, 32), 36),   "conv1_b": uni(ks[1], (32,), 36),
        "conv2_w": uni(ks[2], (288, 64), 288), "conv2_b": uni(ks[3], (64,), 288),
        "fc1a_w": uni(ks[4], (64, 16), 64),    "fc1a_b": uni(ks[5], (16,), 64),
        "fc1b_w": uni(ks[6], (16, 4), 16),     "fc1b_b": uni(ks[7], (4,), 16),
        "fc2a_w": uni(ks[8], (4, 8), 4),       "fc2a_b": uni(ks[9], (8,), 4),
        "fc2b_w": uni(ks[10], (8, 4), 8),      "fc2b_b": uni(ks[11], (4,), 8),
        "sfc1_w": uni(ks[12], (8, 16), 8),     "sfc1_b": uni(ks[13], (16,), 8),
        "sfc2_w": uni(ks[14], (16, 16), 16),   "sfc2_b": uni(ks[15], (16,), 16),
        "sfc3_w": uni(ks[16], (16, 1), 16),    "sfc3_b": uni(ks[17], (1,), 16),
    }


def _reference_forward(params, tensor1, tensor2):
    """Pure-JAX (XLA) reference of the PyTorch NyNetwork forward (eval mode)."""
    f32 = jnp.float32
    silu = lambda v: v * jax.nn.sigmoid(v)
    dn = ("NCHW", "HWIO", "NCHW")

    def pool2(v):
        return jax.lax.reduce_window(v, -jnp.inf, jax.lax.max,
                                     (1, 1, 2, 2), (1, 1, 2, 2), "VALID")

    x = tensor1.astype(f32)
    y = jax.lax.conv_general_dilated(x, params["conv1_w"].reshape(3, 3, 4, 32),
                                     (1, 1), "VALID", dimension_numbers=dn)
    y = pool2(silu(y + params["conv1_b"].reshape(1, 32, 1, 1)))
    y = jax.lax.conv_general_dilated(y, params["conv2_w"].reshape(3, 3, 32, 64),
                                     (1, 1), "VALID", dimension_numbers=dn)
    y = pool2(silu(y + params["conv2_b"].reshape(1, 64, 1, 1)))
    t1 = y.reshape(y.shape[0], 64)
    t1 = silu(t1 @ params["fc1a_w"] + params["fc1a_b"])
    t1 = t1 @ params["fc1b_w"] + params["fc1b_b"]
    t2 = silu(tensor2.astype(f32) @ params["fc2a_w"] + params["fc2a_b"])
    t2 = t2 @ params["fc2b_w"] + params["fc2b_b"]
    h = silu(jnp.concatenate([t1, t2], axis=1) @ params["sfc1_w"] + params["sfc1_b"])
    h = silu(h @ params["sfc2_w"] + params["sfc2_b"])
    return h @ params["sfc3_w"] + params["sfc3_b"]


if __name__ == "__main__":
    key = jax.random.PRNGKey(0)
    k1, k2, kp = jax.random.split(key, 3)

    B = 2
    tensor1 = jax.random.normal(k1, (B, 4, 10, 10), jnp.float32)   # NCHW like torch
    tensor2 = jax.random.normal(k2, (B, 4), jnp.float32)
    params = init_params(kp)

    out = jax.jit(ny_network_forward)(params, tensor1, tensor2)
    out = jax.block_until_ready(out)

    assert out.shape == (B, 1), out.shape
    assert out.dtype == jnp.float32
    assert bool(jnp.all(jnp.isfinite(out)))

    ref = _reference_forward(params, tensor1, tensor2)
    max_err = float(jnp.max(jnp.abs(out - ref)))
    assert max_err < 5e-2, f"kernel/reference mismatch: max abs err = {max_err}"

    print("KERNEL_OK")
</pallas_src>

<mosaic_0001>
module attributes {stable_mosaic.version = 11 : i64} {
  func.func @_fused_forward_kernel(%arg0: memref<128x36xf32, #tpu.memory_space<vmem>>, %arg1: memref<2x4xf32, #tpu.memory_space<vmem>>, %arg2: memref<472x64xf32, #tpu.memory_space<vmem>>, %arg3: memref<16x64xf32, #tpu.memory_space<vmem>>, %arg4: memref<2x1xf32, #tpu.memory_space<vmem>>) attributes {dimension_semantics = [], scalar_prefetch = 0 : i64, scratch_operands = 0 : i64, tpu.core_type = #tpu.core_type<tc>} {
    %c0 = arith.constant 0 : index
    %c0_0 = arith.constant 0 : index
    %0 = vector.load %arg0[%c0, %c0_0] : memref<128x36xf32, #tpu.memory_space<vmem>>, vector<128x36xf32>
    %c0_1 = arith.constant 0 : index
    %c0_2 = arith.constant 0 : index
    %1 = vector.load %arg2[%c0_1, %c0_2] : memref<472x64xf32, #tpu.memory_space<vmem>>, vector<36x32xf32>
    %cst = arith.constant dense<0.000000e+00> : vector<128x32xf32>
    %2 = tpu.matmul %0, %1, %cst {dimension_numbers = #tpu.dot_dimension_numbers<[1], [0], [0], [1], [0, 0, 1, 1], [], []>} : vector<128x36xf32>, vector<36x32xf32>, vector<128x32xf32> -> vector<128x32xf32>
    %c0_3 = arith.constant 0 : index
    %c0_4 = arith.constant 0 : index
    %3 = vector.load %arg3[%c0_3, %c0_4] : memref<16x64xf32, #tpu.memory_space<vmem>>, vector<1x32xf32>
    %4 = vector.broadcast %3 : vector<1x32xf32> to vector<128x32xf32>
    %5 = arith.addf %2, %4 : vector<128x32xf32>
    %6 = arith.negf %5 : vector<128x32xf32>
    %7 = math.exp %6 : vector<128x32xf32>
    %cst_5 = arith.constant 1.000000e+00 : f32
    %8 = vector.broadcast %cst_5 : f32 to vector<128x32xf32>
    %9 = arith.addf %8, %7 : vector<128x32xf32>
    %10 = arith.divf %8, %9 : vector<128x32xf32>
    %11 = arith.mulf %5, %10 : vector<128x32xf32>
    %12 = vector.extract_strided_slice %11 {offsets = [0, 0], sizes = [32, 32], strides = [1, 1]} : vector<128x32xf32> to vector<32x32xf32>
    %13 = vector.extract_strided_slice %11 {offsets = [32, 0], sizes = [32, 32], strides = [1, 1]} : vector<128x32xf32> to vector<32x32xf32>
    %14 = arith.maximumf %12, %13 : vector<32x32xf32>
    %15 = vector.extract_strided_slice %11 {offsets = [64, 0], sizes = [32, 32], strides = [1, 1]} : vector<128x32xf32> to vector<32x32xf32>
    %16 = vector.extract_strided_slice %11 {offsets = [96, 0], sizes = [32, 32], strides = [1, 1]} : vector<128x32xf32> to vector<32x32xf32>
    %17 = arith.maximumf %15, %16 : vector<32x32xf32>
    %18 = arith.maximumf %14, %17 : vector<32x32xf32>
    %19 = vector.extract_strided_slice %18 {offsets = [0, 0], sizes = [4, 32], strides = [1, 1]} : vector<32x32xf32> to vector<4x32xf32>
    %20 = vector.extract_strided_slice %18 {offsets = [8, 0], sizes = [4, 32], strides = [1, 1]} : vector<32x32xf32> to vector<4x32xf32>
    %21 = tpu.concatenate %19, %20 in 0 : vector<4x32xf32>, vector<4x32xf32> -> vector<8x32xf32>
    %22 = vector.extract_strided_slice %18 {offsets = [2, 0], sizes = [4, 32], strides = [1, 1]} : vector<32x32xf32> to vector<4x32xf32>
    %23 = vector.extract_strided_slice %18 {offsets = [10, 0], sizes = [4, 32], strides = [1, 1]} : vector<32x32xf32> to vector<4x32xf32>
    %24 = tpu.concatenate %22, %23 in 0 : vector<4x32xf32>, vector<4x32xf32> -> vector<8x32xf32>
    %25 = vector.extract_strided_slice %18 {offsets = [4, 0], sizes = [4, 32], strides = [1, 1]} : vector<32x32xf32> to vector<4x32xf32>
    %26 = vector.extract_strided_slice %18 {offsets = [12, 0], sizes = [4, 32], strides = [1, 1]} : vector<32x32xf32> to vector<4x32xf32>
    %27 = tpu.concatenate %25, %26 in 0 : vector<4x32xf32>, vector<4x32xf32> -> vector<8x32xf32>
    %28 = vector.extract_strided_slice %18 {offsets = [8, 0], sizes = [4, 32], strides = [1, 1]} : vector<32x32xf32> to vector<4x32xf32>
    %29 = vector.extract_strided_slice %18 {offsets = [16, 0], sizes = [4, 32], strides = [1, 1]} : vector<32x32xf32> to vector<4x32xf32>
    %30 = tpu.concatenate %28, %29 in 0 : vector<4x32xf32>, vector<4x32xf32> -> vector<8x32xf32>
    %31 = vector.extract_strided_slice %18 {offsets = [10, 0], sizes = [4, 32], strides = [1, 1]} : vector<32x32xf32> to vector<4x32xf32>
    %32 = vector.extract_strided_slice %18 {offsets = [18, 0], sizes = [4, 32], strides = [1, 1]} : vector<32x32xf32> to vector<4x32xf32>
    %33 = tpu.concatenate %31, %32 in 0 : vector<4x32xf32>, vector<4x32xf32> -> vector<8x32xf32>
    %34 = vector.extract_strided_slice %18 {offsets = [12, 0], sizes = [4, 32], strides = [1, 1]} : vector<32x32xf32> to vector<4x32xf32>
    %35 = vector.extract_strided_slice %18 {offsets = [20, 0], sizes = [4, 32], strides = [1, 1]} : vector<32x32xf32> to vector<4x32xf32>
    %36 = tpu.concatenate %34, %35 in 0 : vector<4x32xf32>, vector<4x32xf32> -> vector<8x32xf32>
    %37 = vector.extract_strided_slice %18 {offsets = [16, 0], sizes = [4, 32], strides = [1, 1]} : vector<32x32xf32> to vector<4x32xf32>
    %38 = vector.extract_strided_slice %18 {offsets = [24, 0], sizes = [4, 32], strides = [1, 1]} : vector<32x32xf32> to vector<4x32xf32>
    %39 = tpu.concatenate %37, %38 in 0 : vector<4x32xf32>, vector<4x32xf32> -> vector<8x32xf32>
    %40 = vector.extract_strided_slice %18 {offsets = [18, 0], sizes = [4, 32], strides = [1, 1]} : vector<32x32xf32> to vector<4x32xf32>
    %41 = vector.extract_strided_slice %18 {offsets = [26, 0], sizes = [4, 32], strides = [1, 1]} : vector<32x32xf32> to vector<4x32xf32>
    %42 = tpu.concatenate %40, %41 in 0 : vector<4x32xf32>, vector<4x32xf32> -> vector<8x32xf32>
    %43 = vector.extract_strided_slice %18 {offsets = [20, 0], sizes = [4, 32], strides = [1, 1]} : vector<32x32xf32> to vector<4x32xf32>
    %44 = vector.extract_strided_slice %18 {offsets = [28, 0], sizes = [4, 32], strides = [1, 1]} : vector<32x32xf32> to vector<4x32xf32>
    %45 = tpu.concatenate %43, %44 in 0 : vector<4x32xf32>, vector<4x32xf32> -> vector<8x32xf32>
    %46 = tpu.concatenate %21, %24, %27, %30, %33, %36, %39, %42, %45 in 1 : vector<8x32xf32>, vector<8x32xf32>, vector<8x32xf32>, vector<8x32xf32>, vector<8x32xf32>, vector<8x32xf32>, vector<8x32xf32>, vector<8x32xf32>, vector<8x32xf32> -> vector<8x288xf32>
    %c40 = arith.constant 40 : index
    %c0_6 = arith.constant 0 : index
    %47 = vector.load %arg2[%c40, %c0_6] : memref<472x64xf32, #tpu.memory_space<vmem>>, vector<288x64xf32>
    %cst_7 = arith.constant dense<0.000000e+00> : vector<8x64xf32>
    %48 = tpu.matmul %46, %47, %cst_7 {dimension_numbers = #tpu.dot_dimension_numbers<[1], [0], [0], [1], [0, 0, 1, 1], [], []>} : vector<8x288xf32>, vector<288x64xf32>, vector<8x64xf32> -> vector<8x64xf32>
    %c1 = arith.constant 1 : index
    %c0_8 = arith.constant 0 : index
    %49 = vector.load %arg3[%c1, %c0_8] : memref<16x64xf32, #tpu.memory_space<vmem>>, vector<1x64xf32>
    %50 = vector.broadcast %49 : vector<1x64xf32> to vector<8x64xf32>
    %51 = arith.addf %48, %50 : vector<8x64xf32>
    %52 = arith.negf %51 : vector<8x64xf32>
    %53 = math.exp %52 : vector<8x64xf32>
    %cst_9 = arith.constant 1.000000e+00 : f32
    %54 = vector.broadcast %cst_9 : f32 to vector<8x64xf32>
    %55 = arith.addf %54, %53 : vector<8x64xf32>
    %56 = arith.divf %54, %55 : vector<8x64xf32>
    %57 = arith.mulf %51, %56 : vector<8x64xf32>
    %58 = vector.extract_strided_slice %57 {offsets = [0, 0], sizes = [2, 64], strides = [1, 1]} : vector<8x64xf32> to vector<2x64xf32>
    %59 = vector.extract_strided_slice %57 {offsets = [2, 0], sizes = [2, 64], strides = [1, 1]} : vector<8x64xf32> to vector<2x64xf32>
    %60 = arith.maximumf %58, %59 : vector<2x64xf32>
    %61 = vector.extract_strided_slice %57 {offsets = [4, 0], sizes = [2, 64], strides = [1, 1]} : vector<8x64xf32> to vector<2x64xf32>
    %62 = vector.extract_strided_slice %57 {offsets = [6, 0], sizes = [2, 64], strides = [1, 1]} : vector<8x64xf32> to vector<2x64xf32>
    %63 = arith.maximumf %61, %62 : vector<2x64xf32>
    %64 = arith.maximumf %60, %63 : vector<2x64xf32>
    %c328 = arith.constant 328 : index
    %c0_10 = arith.constant 0 : index
    %65 = vector.load %arg2[%c328, %c0_10] : memref<472x64xf32, #tpu.memory_space<vmem>>, vector<64x16xf32>
    %cst_11 = arith.constant dense<0.000000e+00> : vector<2x16xf32>
    %66 = tpu.matmul %64, %65, %cst_11 {dimension_numbers = #tpu.dot_dimension_numbers<[1], [0], [0], [1], [0, 0, 1, 1], [], []>} : vector<2x64xf32>, vector<64x16xf32>, vector<2x16xf32> -> vector<2x16xf32>
    %c2 = arith.constant 2 : index
    %c0_12 = arith.constant 0 : index
    %67 = vector.load %arg3[%c2, %c0_12] : memref<16x64xf32, #tpu.memory_space<vmem>>, vector<1x16xf32>
    %68 = vector.broadcast %67 : vector<1x16xf32> to vector<2x16xf32>
    %69 = arith.addf %66, %68 : vector<2x16xf32>
    %70 = arith.negf %69 : vector<2x16xf32>
    %71 = math.exp %70 : vector<2x16xf32>
    %cst_13 = arith.constant 1.000000e+00 : f32
    %72 = vector.broadcast %cst_13 : f32 to vector<2x16xf32>
    %73 = arith.addf %72, %71 : vector<2x16xf32>
    %74 = arith.divf %72, %73 : vector<2x16xf32>
    %75 = arith.mulf %69, %74 : vector<2x16xf32>
    %c392 = arith.constant 392 : index
    %c0_14 = arith.constant 0 : index
    %76 = vector.load %arg2[%c392, %c0_14] : memref<472x64xf32, #tpu.memory_space<vmem>>, vector<16x4xf32>
    %cst_15 = arith.constant dense<0.000000e+00> : vector<2x4xf32>
    %77 = tpu.matmul %75, %76, %cst_15 {dimension_numbers = #tpu.dot_dimension_numbers<[1], [0], [0], [1], [0, 0, 1, 1], [], []>} : vector<2x16xf32>, vector<16x4xf32>, vector<2x4xf32> -> vector<2x4xf32>
    %c3 = arith.constant 3 : index
    %c0_16 = arith.constant 0 : index
    %78 = vector.load %arg3[%c3, %c0_16] : memref<16x64xf32, #tpu.memory_space<vmem>>, vector<1x4xf32>
    %79 = vector.broadcast %78 : vector<1x4xf32> to vector<2x4xf32>
    %80 = arith.addf %77, %79 : vector<2x4xf32>
    %c0_17 = arith.constant 0 : index
    %c0_18 = arith.constant 0 : index
    %81 = vector.load %arg1[%c0_17, %c0_18] : memref<2x4xf32, #tpu.memory_space<vmem>>, vector<2x4xf32>
    %c408 = arith.constant 408 : index
    %c0_19 = arith.constant 0 : index
    %82 = vector.load %arg2[%c408, %c0_19] : memref<472x64xf32, #tpu.memory_space<vmem>>, vector<4x8xf32>
    %cst_20 = arith.constant dense<0.000000e+00> : vector<2x8xf32>
    %83 = tpu.matmul %81, %82, %cst_20 {dimension_numbers = #tpu.dot_dimension_numbers<[1], [0], [0], [1], [0, 0, 1, 1], [], []>} : vector<2x4xf32>, vector<4x8xf32>, vector<2x8xf32> -> vector<2x8xf32>
    %c4 = arith.constant 4 : index
    %c0_21 = arith.constant 0 : index
    %84 = vector.load %arg3[%c4, %c0_21] : memref<16x64xf32, #tpu.memory_space<vmem>>, vector<1x8xf32>
    %85 = vector.broadcast %84 : vector<1x8xf32> to vector<2x8xf32>
    %86 = arith.addf %83, %85 : vector<2x8xf32>
    %87 = arith.negf %86 : vector<2x8xf32>
    %88 = math.exp %87 : vector<2x8xf32>
    %cst_22 = arith.constant 1.000000e+00 : f32
    %89 = vector.broadcast %cst_22 : f32 to vector<2x8xf32>
    %90 = arith.addf %89, %88 : vector<2x8xf32>
    %91 = arith.divf %89, %90 : vector<2x8xf32>
    %92 = arith.mulf %86, %91 : vector<2x8xf32>
    %c416 = arith.constant 416 : index
    %c0_23 = arith.constant 0 : index
    %93 = vector.load %arg2[%c416, %c0_23] : memref<472x64xf32, #tpu.memory_space<vmem>>, vector<8x4xf32>
    %cst_24 = arith.constant dense<0.000000e+00> : vector<2x4xf32>
    %94 = tpu.matmul %92, %93, %cst_24 {dimension_numbers = #tpu.dot_dimension_numbers<[1], [0], [0], [1], [0, 0, 1, 1], [], []>} : vector<2x8xf32>, vector<8x4xf32>, vector<2x4xf32> -> vector<2x4xf32>
    %c5 = arith.constant 5 : index
    %c0_25 = arith.constant 0 : index
    %95 = vector.load %arg3[%c5, %c0_25] : memref<16x64xf32, #tpu.memory_space<vmem>>, vector<1x4xf32>
    %96 = vector.broadcast %95 : vector<1x4xf32> to vector<2x4xf32>
    %97 = arith.addf %94, %96 : vector<2x4xf32>
    %c424 = arith.constant 424 : index
    %c0_26 = arith.constant 0 : index
    %98 = vector.load %arg2[%c424, %c0_26] : memref<472x64xf32, #tpu.memory_space<vmem>>, vector<4x16xf32>
    %cst_27 = arith.constant dense<0.000000e+00> : vector<2x16xf32>
    %99 = tpu.matmul %80, %98, %cst_27 {dimension_numbers = #tpu.dot_dimension_numbers<[1], [0], [0], [1], [0, 0, 1, 1], [], []>} : vector<2x4xf32>, vector<4x16xf32>, vector<2x16xf32> -> vector<2x16xf32>
    %c432 = arith.constant 432 : index
    %c0_28 = arith.constant 0 : index
    %100 = vector.load %arg2[%c432, %c0_28] : memref<472x64xf32, #tpu.memory_space<vmem>>, vector<4x16xf32>
    %cst_29 = arith.constant dense<0.000000e+00> : vector<2x16xf32>
    %101 = tpu.matmul %97, %100, %cst_29 {dimension_numbers = #tpu.dot_dimension_numbers<[1], [0], [0], [1], [0, 0, 1, 1], [], []>} : vector<2x4xf32>, vector<4x16xf32>, vector<2x16xf32> -> vector<2x16xf32>
    %102 = arith.addf %99, %101 : vector<2x16xf32>
    %c6 = arith.constant 6 : index
    %c0_30 = arith.constant 0 : index
    %103 = vector.load %arg3[%c6, %c0_30] : memref<16x64xf32, #tpu.memory_space<vmem>>, vector<1x16xf32>
    %104 = vector.broadcast %103 : vector<1x16xf32> to vector<2x16xf32>
    %105 = arith.addf %102, %104 : vector<2x16xf32>
    %106 = arith.negf %105 : vector<2x16xf32>
    %107 = math.exp %106 : vector<2x16xf32>
    %cst_31 = arith.constant 1.000000e+00 : f32
    %108 = vector.broadcast %cst_31 : f32 to vector<2x16xf32>
    %109 = arith.addf %108, %107 : vector<2x16xf32>
    %110 = arith.divf %108, %109 : vector<2x16xf32>
    %111 = arith.mulf %105, %110 : vector<2x16xf32>
    %c440 = arith.constant 440 : index
    %c0_32 = arith.constant 0 : index
    %112 = vector.load %arg2[%c440, %c0_32] : memref<472x64xf32, #tpu.memory_space<vmem>>, vector<16x16xf32>
    %cst_33 = arith.constant dense<0.000000e+00> : vector<2x16xf32>
    %113 = tpu.matmul %111, %112, %cst_33 {dimension_numbers = #tpu.dot_dimension_numbers<[1], [0], [0], [1], [0, 0, 1, 1], [], []>} : vector<2x16xf32>, vector<16x16xf32>, vector<2x16xf32> -> vector<2x16xf32>
    %c7 = arith.constant 7 : index
    %c0_34 = arith.constant 0 : index
    %114 = vector.load %arg3[%c7, %c0_34] : memref<16x64xf32, #tpu.memory_space<vmem>>, vector<1x16xf32>
    %115 = vector.broadcast %114 : vector<1x16xf32> to vector<2x16xf32>
    %116 = arith.addf %113, %115 : vector<2x16xf32>
    %117 = arith.negf %116 : vector<2x16xf32>
    %118 = math.exp %117 : vector<2x16xf32>
    %cst_35 = arith.constant 1.000000e+00 : f32
    %119 = vector.broadcast %cst_35 : f32 to vector<2x16xf32>
    %120 = arith.addf %119, %118 : vector<2x16xf32>
    %121 = arith.divf %119, %120 : vector<2x16xf32>
    %122 = arith.mulf %116, %121 : vector<2x16xf32>
    %c456 = arith.constant 456 : index
    %c0_36 = arith.constant 0 : index
    %123 = vector.load %arg2[%c456, %c0_36] : memref<472x64xf32, #tpu.memory_space<vmem>>, vector<16x1xf32>
    %cst_37 = arith.constant dense<0.000000e+00> : vector<2x1xf32>
    %124 = tpu.matmul %122, %123, %cst_37 {dimension_numbers = #tpu.dot_dimension_numbers<[1], [0], [0], [1], [0, 0, 1, 1], [], []>} : vector<2x16xf32>, vector<16x1xf32>, vector<2x1xf32> -> vector<2x1xf32>
    %c8 = arith.constant 8 : index
    %c0_38 = arith.constant 0 : index
    %125 = vector.load %arg3[%c8, %c0_38] : memref<16x64xf32, #tpu.memory_space<vmem>>, vector<1x1xf32>
    %126 = vector.broadcast %125 : vector<1x1xf32> to vector<2x1xf32>
    %127 = arith.addf %124, %126 : vector<2x1xf32>
    %c0_39 = arith.constant 0 : index
    %c0_40 = arith.constant 0 : index
    %128 = vector.load %arg4[%c0_39, %c0_40] : memref<2x1xf32, #tpu.memory_space<vmem>>, vector<2x1xf32>
    tpu.vector_store %arg4[%c0_39, %c0_40], %127 {strides = array<i32>} : memref<2x1xf32, #tpu.memory_space<vmem>>, vector<2x1xf32>,
    return
  }
}

</mosaic_0001>

<llo_original>
// kernel: ny_network_forward.1
$region0: #{ny_network_forward.1}
  #allocation0 [shape = 'u32[]', space=smem, size = 0x4, offset = 0x4, fixed_abs, tag = 'smem constant byte address 0x4 - core index']
  #allocation1 [shape = 'u32[72,128]{1,0:T(1,128)}', space=vmem, size = 0x9000, scoped, tag = 'internal scratch']
  %s0 = inlined_call_operand.vmem [shape: f32[128,36], index: 0, kind: input, shape index: {}]
  %s1 = inlined_call_operand.vmem [shape: f32[2,4], index: 1, kind: input, shape index: {}]
  %s2 = inlined_call_operand.vmem [shape: f32[472,64], index: 2, kind: input, shape index: {}]
  %s3 = inlined_call_operand.vmem [shape: f32[16,64], index: 3, kind: input, shape index: {}]
  %s4 = inlined_call_operand.vmem [shape: f32[2,1], index: 4, kind: output, shape index: {}]
  %s5 = sld [smem:[#allocation0]]
  $region26: #{ny_network_forward.1} parent=0
    _
  %s7 = ssub.s32 1, %s5
  %s8 = scalar_select 0, %s7, %s5
  // Predicated region
  $region2: #{ny_network_forward.1} parent=0 // pred_check
    _
  $region3: #{ny_network_forward.1} parent=0 // pred_check_branch
    %10 = sbr.rel (0) target = $region5
  $region4: #{ny_network_forward.1} parent=0 // pred_region
    _
  $region5: #{ny_network_forward.1} parent=0 // pred_fallthru
    _
  // Predicated region
  $region6: #{ny_network_forward.1} parent=0 // pred_check
    _
  $region7: #{ny_network_forward.1} parent=0 // pred_check_branch
    %12 = sbr.rel (0) target = $region9
  $region8: #{ny_network_forward.1} parent=0 // pred_region
    _
  $region9: #{ny_network_forward.1} parent=0 // pred_fallthru
    _
  // Predicated region
  $region10: #{ny_network_forward.1} parent=0 // pred_check
    _
  $region11: #{ny_network_forward.1} parent=0 // pred_check_branch
    %14 = sbr.rel (0) target = $region13
  $region12: #{ny_network_forward.1} parent=0 // pred_region
    _
  $region13: #{ny_network_forward.1} parent=0 // pred_fallthru
    _
  // Predicated region
  $region14: #{ny_network_forward.1} parent=0 // pred_check
    _
  $region15: #{ny_network_forward.1} parent=0 // pred_check_branch
    %16 = sbr.rel (0) target = $region17
  $region16: #{ny_network_forward.1} parent=0 // pred_region
    _
  $region17: #{ny_network_forward.1} parent=0 // pred_fallthru
    _
  %v17 = vld [vmem:[%s0] sm:$0xff]
  %v18 = vld [vmem:[%s0 + $0x8] sm:$0xff]
  %v19 = vld [vmem:[%s0 + $0x10] sm:$0xff]
  %v20 = vld [vmem:[%s0 + $0x18] sm:$0xff]
  %v21 = vld [vmem:[%s0 + $0x20] sm:$0xff]
  %v22 = vld [vmem:[%s0 + $0x28] sm:$0xff]
  %v23 = vld [vmem:[%s0 + $0x30] sm:$0xff]
  %v24 = vld [vmem:[%s0 + $0x38] sm:$0xff]
  %v25 = vld [vmem:[%s0 + $0x40] sm:$0xff]
  %v26 = vld [vmem:[%s0 + $0x48] sm:$0xff]
  %v27 = vld [vmem:[%s0 + $0x50] sm:$0xff]
  %v28 = vld [vmem:[%s0 + $0x58] sm:$0xff]
  %v29 = vld [vmem:[%s0 + $0x60] sm:$0xff]
  %v30 = vld [vmem:[%s0 + $0x68] sm:$0xff]
  %v31 = vld [vmem:[%s0 + $0x70] sm:$0xff]
  %v32 = vld [vmem:[%s0 + $0x78] sm:$0xff]
  %v33 = vld [vmem:[%s2] sm:$0xff]
  %v34 = vld [vmem:[%s2 + $0x8] sm:$0xff]
  %v35 = vld [vmem:[%s2 + $0x10] sm:$0xff]
  %v36 = vld [vmem:[%s2 + $0x18] sm:$0xff]
  %v37 = vld [vmem:[%s2 + $0x20] sm:$0xf]
  %v38 = vld [vmem:[%s3] sm:$0x1]
  %v39 = vperm.slane %v38, 0
  %vm40 = vcmask 293888
  %v42 = vsel %vm40, %v17, 0
  %v45 = vsel %vm40, %v18, 0
  %v48 = vsel %vm40, %v19, 0
  %v51 = vsel %vm40, %v20, 0
  %v54 = vsel %vm40, %v21, 0
  %v57 = vsel %vm40, %v22, 0
  %v60 = vsel %vm40, %v23, 0
  %v63 = vsel %vm40, %v24, 0
  %v66 = vsel %vm40, %v25, 0
  %v69 = vsel %vm40, %v26, 0
  %v72 = vsel %vm40, %v27, 0
  %v75 = vsel %vm40, %v28, 0
  %v78 = vsel %vm40, %v29, 0
  %v81 = vsel %vm40, %v30, 0
  %v84 = vsel %vm40, %v31, 0
  %v87 = vsel %vm40, %v32, 0
  %vm89 = vcmask 1043456
  %v91 = vsel %vm89, %v37, 0
  %93 = vmatpush.msra.mxu0 0.0
  %94 = vmatpush.msra.mxu0 0.0
  %95 = vmatpush.msra.mxu0 0.0
  %96 = vmatpush.msra.mxu0 0.0
  %97 = vmatpush.msra.mxu0 0.0
  %98 = vmatpush.msra.mxu0 0.0
  %99 = vmatpush.msra.mxu0 0.0
  %100 = vmatpush.msra.mxu0 0.0
  %101 = vmatpush.msra.mxu0 0.0
  %102 = vmatpush.msra.mxu0 0.0
  %103 = vmatpush.msra.mxu0 0.0
  %104 = vmatpush.msra.mxu0 %v91
  %105 = vmatpush.msra.mxu0 %v36
  %106 = vmatpush.msra.mxu0 %v35
  %107 = vmatpush.msra.mxu0 %v34
  %108 = vmatpush.msra.mxu0 %v33
  %109 = vmatmul.f32.gmra.mxu0 %v42
  %v110 = vpop.f32.mrf.mxu0
  %v111 = vadd.f32 %v39, %v110
  %112 = vmatmul.f32.gmra.mxu0 %v45
  %v113 = vpop.f32.mrf.mxu0
  %v114 = vadd.f32 %v39, %v113
  %115 = vmatmul.f32.gmra.mxu0 %v48
  %v116 = vpop.f32.mrf.mxu0
  %v117 = vadd.f32 %v39, %v116
  %118 = vmatmul.f32.gmra.mxu0 %v51
  %v119 = vpop.f32.mrf.mxu0
  %v120 = vadd.f32 %v39, %v119
  %121 = vmatmul.f32.gmra.mxu0 %v54
  %v122 = vpop.f32.mrf.mxu0
  %v123 = vadd.f32 %v39, %v122
  %124 = vmatmul.f32.gmra.mxu0 %v57
  %v125 = vpop.f32.mrf.mxu0
  %v126 = vadd.f32 %v39, %v125
  %127 = vmatmul.f32.gmra.mxu0 %v60
  %v128 = vpop.f32.mrf.mxu0
  %v129 = vadd.f32 %v39, %v128
  %130 = vmatmul.f32.gmra.mxu0 %v63
  %v131 = vpop.f32.mrf.mxu0
  %v132 = vadd.f32 %v39, %v131
  %133 = vmatmul.f32.gmra.mxu0 %v66
  %v134 = vpop.f32.mrf.mxu0
  %v135 = vadd.f32 %v39, %v134
  %136 = vmatmul.f32.gmra.mxu0 %v69
  %v137 = vpop.f32.mrf.mxu0
  %v138 = vadd.f32 %v39, %v137
  %139 = vmatmul.f32.gmra.mxu0 %v72
  %v140 = vpop.f32.mrf.mxu0
  %v141 = vadd.f32 %v39, %v140
  %142 = vmatmul.f32.gmra.mxu0 %v75
  %v143 = vpop.f32.mrf.mxu0
  %v144 = vadd.f32 %v39, %v143
  %145 = vmatmul.f32.gmra.mxu0 %v78
  %v146 = vpop.f32.mrf.mxu0
  %v147 = vadd.f32 %v39, %v146
  %148 = vmatmul.f32.gmra.mxu0 %v81
  %v149 = vpop.f32.mrf.mxu0
  %v150 = vadd.f32 %v39, %v149
  %151 = vmatmul.f32.gmra.mxu0 %v84
  %v152 = vpop.f32.mrf.mxu0
  %v153 = vadd.f32 %v39, %v152
  %154 = vmatmul.f32.gmra.mxu0 %v87
  %v155 = vpop.f32.mrf.mxu0
  %v156 = vadd.f32 %v39, %v155
  %157 = vdwg.mxu0
  %v158 = vxor.u32 %v111, 2147483648
  %v159 = vxor.u32 %v114, 2147483648
  %v160 = vxor.u32 %v117, 2147483648
  %v161 = vxor.u32 %v120, 2147483648
  %v162 = vxor.u32 %v123, 2147483648
  %v163 = vxor.u32 %v126, 2147483648
  %v164 = vxor.u32 %v129, 2147483648
  %v165 = vxor.u32 %v132, 2147483648
  %v166 = vxor.u32 %v135, 2147483648
  %v167 = vxor.u32 %v138, 2147483648
  %v168 = vxor.u32 %v141, 2147483648
  %v169 = vxor.u32 %v144, 2147483648
  %v170 = vxor.u32 %v147, 2147483648
  %v171 = vxor.u32 %v150, 2147483648
  %v172 = vxor.u32 %v153, 2147483648
  %v173 = vxor.u32 %v156, 2147483648
  %v174 = vmul.f32 %v158, 1.442695
  %v175 = vpow.pop %v174
  %v176 = vmul.f32 %v159, 1.442695
  %v177 = vpow.pop %v176
  %v178 = vmul.f32 %v160, 1.442695
  %v179 = vpow.pop %v178
  %v180 = vmul.f32 %v161, 1.442695
  %v181 = vpow.pop %v180
  %v182 = vmul.f32 %v162, 1.442695
  %v183 = vpow.pop %v182
  %v184 = vmul.f32 %v163, 1.442695
  %v185 = vpow.pop %v184
  %v186 = vmul.f32 %v164, 1.442695
  %v187 = vpow.pop %v186
  %v188 = vmul.f32 %v165, 1.442695
  %v189 = vpow.pop %v188
  %v190 = vmul.f32 %v166, 1.442695
  %v191 = vpow.pop %v190
  %v192 = vmul.f32 %v167, 1.442695
  %v193 = vpow.pop %v192
  %v194 = vmul.f32 %v168, 1.442695
  %v195 = vpow.pop %v194
  %v196 = vmul.f32 %v169, 1.442695
  %v197 = vpow.pop %v196
  %v198 = vmul.f32 %v170, 1.442695
  %v199 = vpow.pop %v198
  %v200 = vmul.f32 %v171, 1.442695
  %v201 = vpow.pop %v200
  %v202 = vmul.f32 %v172, 1.442695
  %v203 = vpow.pop %v202
  %v204 = vmul.f32 %v173, 1.442695
  %v205 = vpow.pop %v204
  %v206 = vadd.f32 %v175, 1.0
  %v207 = vadd.f32 %v177, 1.0
  %v208 = vadd.f32 %v179, 1.0
  %v209 = vadd.f32 %v181, 1.0
  %v210 = vadd.f32 %v183, 1.0
  %v211 = vadd.f32 %v185, 1.0
  %v212 = vadd.f32 %v187, 1.0
  %v213 = vadd.f32 %v189, 1.0
  %v214 = vadd.f32 %v191, 1.0
  %v215 = vadd.f32 %v193, 1.0
  %v216 = vadd.f32 %v195, 1.0
  %v217 = vadd.f32 %v197, 1.0
  %v218 = vadd.f32 %v199, 1.0
  %v219 = vadd.f32 %v201, 1.0
  %v220 = vadd.f32 %v203, 1.0
  %v221 = vadd.f32 %v205, 1.0
  %v222 = vrcp.pop %v206
  %v223 = vmul.f32 %v206, %v222
  %v224 = vsub.f32 1.0, %v223
  %v225 = vmul.f32 %v222, %v224
  %v226 = vadd.f32 %v222, %v225
  %vm227 = vweird.f32 %v206
  %vm228 = vweird.f32 %v222
  %vm229 = vmor %vm227, %vm228
  %v230 = vsel %vm229, %v222, %v226
  %v231 = vand.u32 2147483647, %v206
  %vm232 = vcmp.eq.f32.partialorder %v231, 8.507059e+37
  %v233 = vand.u32 %v206, 2147483648
  %v234 = vor.u32 1.1754944e-38, %v233
  %v235 = vsel %vm232, %v234, %v230
  %v236 = vmul.f32 1.0, %v235
  %v237 = vrcp.pop %v207
  %v238 = vmul.f32 %v207, %v237
  %v239 = vsub.f32 1.0, %v238
  %v240 = vmul.f32 %v237, %v239
  %v241 = vadd.f32 %v237, %v240
  %vm242 = vweird.f32 %v207
  %vm243 = vweird.f32 %v237
  %vm244 = vmor %vm242, %vm243
  %v245 = vsel %vm244, %v237, %v241
  %v246 = vand.u32 2147483647, %v207
  %vm247 = vcmp.eq.f32.partialorder %v246, 8.507059e+37
  %v248 = vand.u32 %v207, 2147483648
  %v249 = vor.u32 1.1754944e-38, %v248
  %v250 = vsel %vm247, %v249, %v245
  %v251 = vmul.f32 1.0, %v250
  %v252 = vrcp.pop %v208
  %v253 = vmul.f32 %v208, %v252
  %v254 = vsub.f32 1.0, %v253
  %v255 = vmul.f32 %v252, %v254
  %v256 = vadd.f32 %v252, %v255
  %vm257 = vweird.f32 %v208
  %vm258 = vweird.f32 %v252
  %vm259 = vmor %vm257, %vm258
  %v260 = vsel %vm259, %v252, %v256
  %v261 = vand.u32 2147483647, %v208
  %vm262 = vcmp.eq.f32.partialorder %v261, 8.507059e+37
  %v263 = vand.u32 %v208, 2147483648
  %v264 = vor.u32 1.1754944e-38, %v263
  %v265 = vsel %vm262, %v264, %v260
  %v266 = vmul.f32 1.0, %v265
  %v267 = vrcp.pop %v209
  %v268 = vmul.f32 %v209, %v267
  %v269 = vsub.f32 1.0, %v268
  %v270 = vmul.f32 %v267, %v269
  %v271 = vadd.f32 %v267, %v270
  %vm272 = vweird.f32 %v209
  %vm273 = vweird.f32 %v267
  %vm274 = vmor %vm272, %vm273
  %v275 = vsel %vm274, %v267, %v271
  %v276 = vand.u32 2147483647, %v209
  %vm277 = vcmp.eq.f32.partialorder %v276, 8.507059e+37
  %v278 = vand.u32 %v209, 2147483648
  %v279 = vor.u32 1.1754944e-38, %v278
  %v280 = vsel %vm277, %v279, %v275
  %v281 = vmul.f32 1.0, %v280
  %v282 = vrcp.pop %v210
  %v283 = vmul.f32 %v210, %v282
  %v284 = vsub.f32 1.0, %v283
  %v285 = vmul.f32 %v282, %v284
  %v286 = vadd.f32 %v282, %v285
  %vm287 = vweird.f32 %v210
  %vm288 = vweird.f32 %v282
  %vm289 = vmor %vm287, %vm288
  %v290 = vsel %vm289, %v282, %v286
  %v291 = vand.u32 2147483647, %v210
  %vm292 = vcmp.eq.f32.partialorder %v291, 8.507059e+37
  %v293 = vand.u32 %v210, 2147483648
  %v294 = vor.u32 1.1754944e-38, %v293
  %v295 = vsel %vm292, %v294, %v290
  %v296 = vmul.f32 1.0, %v295
  %v297 = vrcp.pop %v211
  %v298 = vmul.f32 %v211, %v297
  %v299 = vsub.f32 1.0, %v298
  %v300 = vmul.f32 %v297, %v299
  %v301 = vadd.f32 %v297, %v300
  %vm302 = vweird.f32 %v211
  %vm303 = vweird.f32 %v297
  %vm304 = vmor %vm302, %vm303
  %v305 = vsel %vm304, %v297, %v301
  %v306 = vand.u32 2147483647, %v211
  %vm307 = vcmp.eq.f32.partialorder %v306, 8.507059e+37
  %v308 = vand.u32 %v211, 2147483648
  %v309 = vor.u32 1.1754944e-38, %v308
  %v310 = vsel %vm307, %v309, %v305
  %v311 = vmul.f32 1.0, %v310
  %v312 = vrcp.pop %v212
  %v313 = vmul.f32 %v212, %v312
  %v314 = vsub.f32 1.0, %v313
  %v315 = vmul.f32 %v312, %v314
  %v316 = vadd.f32 %v312, %v315
  %vm317 = vweird.f32 %v212
  %vm318 = vweird.f32 %v312
  %vm319 = vmor %vm317, %vm318
  %v320 = vsel %vm319, %v312, %v316
  %v321 = vand.u32 2147483647, %v212
  %vm322 = vcmp.eq.f32.partialorder %v321, 8.507059e+37
  %v323 = vand.u32 %v212, 2147483648
  %v324 = vor.u32 1.1754944e-38, %v323
  %v325 = vsel %vm322, %v324, %v320
  %v326 = vmul.f32 1.0, %v325
  %v327 = vrcp.pop %v213
  %v328 = vmul.f32 %v213, %v327
  %v329 = vsub.f32 1.0, %v328
  %v330 = vmul.f32 %v327, %v329
  %v331 = vadd.f32 %v327, %v330
  %vm332 = vweird.f32 %v213
  %vm333 = vweird.f32 %v327
  %vm334 = vmor %vm332, %vm333
  %v335 = vsel %vm334, %v327, %v331
  %v336 = vand.u32 2147483647, %v213
  %vm337 = vcmp.eq.f32.partialorder %v336, 8.507059e+37
  %v338 = vand.u32 %v213, 2147483648
  %v339 = vor.u32 1.1754944e-38, %v338
  %v340 = vsel %vm337, %v339, %v335
  %v341 = vmul.f32 1.0, %v340
  %v342 = vrcp.pop %v214
  %v343 = vmul.f32 %v214, %v342
  %v344 = vsub.f32 1.0, %v343
  %v345 = vmul.f32 %v342, %v344
  %v346 = vadd.f32 %v342, %v345
  %vm347 = vweird.f32 %v214
  %vm348 = vweird.f32 %v342
  %vm349 = vmor %vm347, %vm348
  %v350 = vsel %vm349, %v342, %v346
  %v351 = vand.u32 2147483647, %v214
  %vm352 = vcmp.eq.f32.partialorder %v351, 8.507059e+37
  %v353 = vand.u32 %v214, 2147483648
  %v354 = vor.u32 1.1754944e-38, %v353
  %v355 = vsel %vm352, %v354, %v350
  %v356 = vmul.f32 1.0, %v355
  %v357 = vrcp.pop %v215
  %v358 = vmul.f32 %v215, %v357
  %v359 = vsub.f32 1.0, %v358
  %v360 = vmul.f32 %v357, %v359
  %v361 = vadd.f32 %v357, %v360
  %vm362 = vweird.f32 %v215
  %vm363 = vweird.f32 %v357
  %vm364 = vmor %vm362, %vm363
  %v365 = vsel %vm364, %v357, %v361
  %v366 = vand.u32 2147483647, %v215
  %vm367 = vcmp.eq.f32.partialorder %v366, 8.507059e+37
  %v368 = vand.u32 %v215, 2147483648
  %v369 = vor.u32 1.1754944e-38, %v368
  %v370 = vsel %vm367, %v369, %v365
  %v371 = vmul.f32 1.0, %v370
  %v372 = vrcp.pop %v216
  %v373 = vmul.f32 %v216, %v372
  %v374 = vsub.f32 1.0, %v373
  %v375 = vmul.f32 %v372, %v374
  %v376 = vadd.f32 %v372, %v375
  %vm377 = vweird.f32 %v216
  %vm378 = vweird.f32 %v372
  %vm379 = vmor %vm377, %vm378
  %v380 = vsel %vm379, %v372, %v376
  %v381 = vand.u32 2147483647, %v216
  %vm382 = vcmp.eq.f32.partialorder %v381, 8.507059e+37
  %v383 = vand.u32 %v216, 2147483648
  %v384 = vor.u32 1.1754944e-38, %v383
  %v385 = vsel %vm382, %v384, %v380
  %v386 = vmul.f32 1.0, %v385
  %v387 = vrcp.pop %v217
  %v388 = vmul.f32 %v217, %v387
  %v389 = vsub.f32 1.0, %v388
  %v390 = vmul.f32 %v387, %v389
  %v391 = vadd.f32 %v387, %v390
  %vm392 = vweird.f32 %v217
  %vm393 = vweird.f32 %v387
  %vm394 = vmor %vm392, %vm393
  %v395 = vsel %vm394, %v387, %v391
  %v396 = vand.u32 2147483647, %v217
  %vm397 = vcmp.eq.f32.partialorder %v396, 8.507059e+37
  %v398 = vand.u32 %v217, 2147483648
  %v399 = vor.u32 1.1754944e-38, %v398
  %v400 = vsel %vm397, %v399, %v395
  %v401 = vmul.f32 1.0, %v400
  %v402 = vrcp.pop %v218
  %v403 = vmul.f32 %v218, %v402
  %v404 = vsub.f32 1.0, %v403
  %v405 = vmul.f32 %v402, %v404
  %v406 = vadd.f32 %v402, %v405
  %vm407 = vweird.f32 %v218
  %vm408 = vweird.f32 %v402
  %vm409 = vmor %vm407, %vm408
  %v410 = vsel %vm409, %v402, %v406
  %v411 = vand.u32 2147483647, %v218
  %vm412 = vcmp.eq.f32.partialorder %v411, 8.507059e+37
  %v413 = vand.u32 %v218, 2147483648
  %v414 = vor.u32 1.1754944e-38, %v413
  %v415 = vsel %vm412, %v414, %v410
  %v416 = vmul.f32 1.0, %v415
  %v417 = vrcp.pop %v219
  %v418 = vmul.f32 %v219, %v417
  %v419 = vsub.f32 1.0, %v418
  %v420 = vmul.f32 %v417, %v419
  %v421 = vadd.f32 %v417, %v420
  %vm422 = vweird.f32 %v219
  %vm423 = vweird.f32 %v417
  %vm424 = vmor %vm422, %vm423
  %v425 = vsel %vm424, %v417, %v421
  %v426 = vand.u32 2147483647, %v219
  %vm427 = vcmp.eq.f32.partialorder %v426, 8.507059e+37
  %v428 = vand.u32 %v219, 2147483648
  %v429 = vor.u32 1.1754944e-38, %v428
  %v430 = vsel %vm427, %v429, %v425
  %v431 = vmul.f32 1.0, %v430
  %v432 = vrcp.pop %v220
  %v433 = vmul.f32 %v220, %v432
  %v434 = vsub.f32 1.0, %v433
  %v435 = vmul.f32 %v432, %v434
  %v436 = vadd.f32 %v432, %v435
  %vm437 = vweird.f32 %v220
  %vm438 = vweird.f32 %v432
  %vm439 = vmor %vm437, %vm438
  %v440 = vsel %vm439, %v432, %v436
  %v441 = vand.u32 2147483647, %v220
  %vm442 = vcmp.eq.f32.partialorder %v441, 8.507059e+37
  %v443 = vand.u32 %v220, 2147483648
  %v444 = vor.u32 1.1754944e-38, %v443
  %v445 = vsel %vm442, %v444, %v440
  %v446 = vmul.f32 1.0, %v445
  %v447 = vrcp.pop %v221
  %v448 = vmul.f32 %v221, %v447
  %v449 = vsub.f32 1.0, %v448
  %v450 = vmul.f32 %v447, %v449
  %v451 = vadd.f32 %v447, %v450
  %vm452 = vweird.f32 %v221
  %vm453 = vweird.f32 %v447
  %vm454 = vmor %vm452, %vm453
  %v455 = vsel %vm454, %v447, %v451
  %v456 = vand.u32 2147483647, %v221
  %vm457 = vcmp.eq.f32.partialorder %v456, 8.507059e+37
  %v458 = vand.u32 %v221, 2147483648
  %v459 = vor.u32 1.1754944e-38, %v458
  %v460 = vsel %vm457, %v459, %v455
  %v461 = vmul.f32 1.0, %v460
  %v462 = vmul.f32 %v111, %v236
  %v463 = vmul.f32 %v114, %v251
  %v464 = vmul.f32 %v117, %v266
  %v465 = vmul.f32 %v120, %v281
  %v466 = vmul.f32 %v123, %v296
  %v467 = vmul.f32 %v126, %v311
  %v468 = vmul.f32 %v129, %v326
  %v469 = vmul.f32 %v132, %v341
  %v470 = vmul.f32 %v135, %v356
  %v471 = vmul.f32 %v138, %v371
  %v472 = vmul.f32 %v141, %v386
  %v473 = vmul.f32 %v144, %v401
  %v474 = vmul.f32 %v147, %v416
  %v475 = vmul.f32 %v150, %v431
  %v476 = vmul.f32 %v153, %v446
  %v477 = vmul.f32 %v156, %v461
  %v478 = vmax.f32 %v462, %v466
  %v479 = vmax.f32 %v463, %v467
  %v480 = vmax.f32 %v464, %v468
  %v481 = vmax.f32 %v465, %v469
  %v482 = vmax.f32 %v470, %v474
  %v483 = vmax.f32 %v471, %v475
  %v484 = vmax.f32 %v472, %v476
  %v485 = vmax.f32 %v473, %v477
  %v486 = vmax.f32 %v478, %v482
  %v487 = vmax.f32 %v479, %v483
  %v488 = vmax.f32 %v480, %v484
  %v489 = vmax.f32 %v481, %v485
  %v491 = vrot.slane %v487, 4
  %v493 = vsel %vm89, %v486, %v491
  %v495 = vrot.slane %v486, 2
  %v497 = vrot.slane %v487, 6
  %v499 = vsel %vm89, %v495, %v497
  %v500 = vrot.slane %v486, 4
  %v502 = vsel %vm89, %v500, %v487
  %v504 = vrot.slane %v488, 4
  %v506 = vsel %vm89, %v487, %v504
  %v507 = vrot.slane %v487, 2
  %v509 = vrot.slane %v488, 6
  %v511 = vsel %vm89, %v507, %v509
  %v512 = vsel %vm89, %v491, %v488
  %v514 = vrot.slane %v489, 4
  %v516 = vsel %vm89, %v488, %v514
  %v517 = vrot.slane %v488, 2
  %v519 = vrot.slane %v489, 6
  %v521 = vsel %vm89, %v517, %v519
  %v522 = vsel %vm89, %v504, %v489
  %524 = vrot.lane.b32.xlu0 %v499, 32
  %v525 = vpop.permute.xlu0 %524
  %528 = vrot.lane.b32.xlu0 %v502, 64
  %v529 = vpop.permute.xlu0 %528
  %532 = vrot.lane.b32.xlu0 %v506, 96
  %v533 = vpop.permute.xlu0 %532
  %536 = vrot.lane.b32.xlu0 %v512, 32
  %v537 = vpop.permute.xlu0 %536
  %540 = vrot.lane.b32.xlu0 %v516, 64
  %v541 = vpop.permute.xlu0 %540
  %544 = vrot.lane.b32.xlu0 %v521, 96
  %v545 = vpop.permute.xlu0 %544
  %vm547 = vcmask 261120
  %v548 = vsel %vm547, %v493, %v525
  %vm549 = vcmask 523264
  %v550 = vsel %vm549, %v548, %v529
  %vm551 = vcmask 785408
  %v552 = vsel %vm551, %v550, %v533
  %v553 = vsel %vm547, %v511, %v537
  %v554 = vsel %vm549, %v553, %v541
  %v555 = vsel %vm551, %v554, %v545
  %v556 = vld [vmem:[%s2 + $0x28] sm:$0xff]
  %v557 = vld [vmem:[%s2 + $0x30] sm:$0xff]
  %v558 = vld [vmem:[%s2 + $0x38] sm:$0xff]
  %v559 = vld [vmem:[%s2 + $0x40] sm:$0xff]
  %v560 = vld [vmem:[%s2 + $0x48] sm:$0xff]
  %v561 = vld [vmem:[%s2 + $0x50] sm:$0xff]
  %v562 = vld [vmem:[%s2 + $0x58] sm:$0xff]
  %v563 = vld [vmem:[%s2 + $0x60] sm:$0xff]
  %v564 = vld [vmem:[%s2 + $0x68] sm:$0xff]
  %v565 = vld [vmem:[%s2 + $0x70] sm:$0xff]
  %v566 = vld [vmem:[%s2 + $0x78] sm:$0xff]
  %v567 = vld [vmem:[%s2 + $0x80] sm:$0xff]
  %v568 = vld [vmem:[%s2 + $0x88] sm:$0xff]
  %v569 = vld [vmem:[%s2 + $0x90] sm:$0xff]
  %v570 = vld [vmem:[%s2 + $0x98] sm:$0xff]
  %v571 = vld [vmem:[%s2 + $0xa0] sm:$0xff]
  %v572 = vld [vmem:[%s2 + $0xa8] sm:$0xff]
  %v573 = vld [vmem:[%s2 + $0xb0] sm:$0xff]
  %v574 = vld [vmem:[%s2 + $0xb8] sm:$0xff]
  %v575 = vld [vmem:[%s2 + $0xc0] sm:$0xff]
  %v576 = vld [vmem:[%s2 + $0xc8] sm:$0xff]
  %v577 = vld [vmem:[%s2 + $0xd0] sm:$0xff]
  %v578 = vld [vmem:[%s2 + $0xd8] sm:$0xff]
  %v579 = vld [vmem:[%s2 + $0xe0] sm:$0xff]
  %v580 = vld [vmem:[%s2 + $0xe8] sm:$0xff]
  %v581 = vld [vmem:[%s2 + $0xf0] sm:$0xff]
  %v582 = vld [vmem:[%s2 + $0xf8] sm:$0xff]
  %v583 = vld [vmem:[%s2 + $0x100] sm:$0xff]
  %v584 = vld [vmem:[%s2 + $0x108] sm:$0xff]
  %v585 = vld [vmem:[%s2 + $0x110] sm:$0xff]
  %v586 = vld [vmem:[%s2 + $0x118] sm:$0xff]
  %v587 = vld [vmem:[%s2 + $0x120] sm:$0xff]
  %v588 = vld [vmem:[%s2 + $0x128] sm:$0xff]
  %v589 = vld [vmem:[%s2 + $0x130] sm:$0xff]
  %v590 = vld [vmem:[%s2 + $0x138] sm:$0xff]
  %v591 = vld [vmem:[%s2 + $0x140] sm:$0xff]
  %v592 = vld [vmem:[%s3 + $0x1] sm:$0x1]
  %v593 = vperm.slane %v592, 0
  %v595 = vsel %vm547, %v522, 0
  %597 = vmatpush.msra.mxu0 %v571
  %598 = vmatpush.msra.mxu0 %v570
  %599 = vmatpush.msra.mxu0 %v569
  %600 = vmatpush.msra.mxu0 %v568
  %601 = vmatpush.msra.mxu0 %v567
  %602 = vmatpush.msra.mxu0 %v566
  %603 = vmatpush.msra.mxu0 %v565
  %604 = vmatpush.msra.mxu0 %v564
  %605 = vmatpush.msra.mxu0 %v563
  %606 = vmatpush.msra.mxu0 %v562
  %607 = vmatpush.msra.mxu0 %v561
  %608 = vmatpush.msra.mxu0 %v560
  %609 = vmatpush.msra.mxu0 %v559
  %610 = vmatpush.msra.mxu0 %v558
  %611 = vmatpush.msra.mxu0 %v557
  %612 = vmatpush.msra.mxu0 %v556
  %613 = vmatmul.f32.gmra.mxu0 %v552
  %v614 = vpop.f32.mrf.mxu0
  %v615 = vadd.f32 %v593, %v614
  %616 = vdwg.mxu0
  %617 = vmatpush.msra.mxu0 %v587
  %618 = vmatpush.msra.mxu0 %v586
  %619 = vmatpush.msra.mxu0 %v585
  %620 = vmatpush.msra.mxu0 %v584
  %621 = vmatpush.msra.mxu0 %v583
  %622 = vmatpush.msra.mxu0 %v582
  %623 = vmatpush.msra.mxu0 %v581
  %624 = vmatpush.msra.mxu0 %v580
  %625 = vmatpush.msra.mxu0 %v579
  %626 = vmatpush.msra.mxu0 %v578
  %627 = vmatpush.msra.mxu0 %v577
  %628 = vmatpush.msra.mxu0 %v576
  %629 = vmatpush.msra.mxu0 %v575
  %630 = vmatpush.msra.mxu0 %v574
  %631 = vmatpush.msra.mxu0 %v573
  %632 = vmatpush.msra.mxu0 %v572
  %633 = vmatmul.f32.gmra.mxu0 %v555
  %v634 = vpop.f32.mrf.mxu0
  %v635 = vadd.f32 %v615, %v634
  %636 = vdwg.mxu0
  %637 = vmatpush.msra.mxu0 0.0
  %638 = vmatpush.msra.mxu0 0.0
  %639 = vmatpush.msra.mxu0 0.0
  %640 = vmatpush.msra.mxu0 0.0
  %641 = vmatpush.msra.mxu0 0.0
  %642 = vmatpush.msra.mxu0 0.0
  %643 = vmatpush.msra.mxu0 0.0
  %644 = vmatpush.msra.mxu0 0.0
  %645 = vmatpush.msra.mxu0 0.0
  %646 = vmatpush.msra.mxu0 0.0
  %647 = vmatpush.msra.mxu0 0.0
  %648 = vmatpush.msra.mxu0 0.0
  %649 = vmatpush.msra.mxu0 %v591
  %650 = vmatpush.msra.mxu0 %v590
  %651 = vmatpush.msra.mxu0 %v589
  %652 = vmatpush.msra.mxu0 %v588
  %653 = vmatmul.f32.gmra.mxu0 %v595
  %v654 = vpop.f32.mrf.mxu0
  %v655 = vadd.f32 %v635, %v654
  %656 = vdwg.mxu0
  %v657 = vxor.u32 %v655, 2147483648
  %v658 = vmul.f32 %v657, 1.442695
  %v659 = vpow.pop %v658
  %v660 = vadd.f32 %v659, 1.0
  %v661 = vrcp.pop %v660
  %v662 = vmul.f32 %v660, %v661
  %v663 = vsub.f32 1.0, %v662
  %v664 = vmul.f32 %v661, %v663
  %v665 = vadd.f32 %v661, %v664
  %vm666 = vweird.f32 %v660
  %vm667 = vweird.f32 %v661
  %vm668 = vmor %vm666, %vm667
  %v669 = vsel %vm668, %v661, %v665
  %v670 = vand.u32 2147483647, %v660
  %vm671 = vcmp.eq.f32.partialorder %v670, 8.507059e+37
  %v672 = vand.u32 %v660, 2147483648
  %v673 = vor.u32 1.1754944e-38, %v672
  %v674 = vsel %vm671, %v673, %v669
  %v675 = vmul.f32 1.0, %v674
  %v676 = vmul.f32 %v655, %v675
  %v678 = vrot.slane %v676, 2
  %v680 = vmax.f32 %v676, %v678
  %v682 = vrot.slane %v680, 4
  %v684 = vmax.f32 %v680, %v682
  %v685 = vld [vmem:[%s2 + $0x148] sm:$0xff]
  %v686 = vld [vmem:[%s2 + $0x150] sm:$0xff]
  %v687 = vld [vmem:[%s2 + $0x158] sm:$0xff]
  %v688 = vld [vmem:[%s2 + $0x160] sm:$0xff]
  %v689 = vld [vmem:[%s2 + $0x168] sm:$0xff]
  %v690 = vld [vmem:[%s2 + $0x170] sm:$0xff]
  %v691 = vld [vmem:[%s2 + $0x178] sm:$0xff]
  %v692 = vld [vmem:[%s2 + $0x180] sm:$0xff]
  %v693 = vld [vmem:[%s3 + $0x2] sm:$0x1]
  %v694 = vperm.slane %v693, 0
  %v696 = vsel %vm549, %v684, 0
  %698 = vmatpush.msra.mxu0 0.0
  %699 = vmatpush.msra.mxu0 0.0
  %700 = vmatpush.msra.mxu0 0.0
  %701 = vmatpush.msra.mxu0 0.0
  %702 = vmatpush.msra.mxu0 0.0
  %703 = vmatpush.msra.mxu0 0.0
  %704 = vmatpush.msra.mxu0 0.0
  %705 = vmatpush.msra.mxu0 0.0
  %706 = vmatpush.msra.mxu0 %v692
  %707 = vmatpush.msra.mxu0 %v691
  %708 = vmatpush.msra.mxu0 %v690
  %709 = vmatpush.msra.mxu0 %v689
  %710 = vmatpush.msra.mxu0 %v688
  %711 = vmatpush.msra.mxu0 %v687
  %712 = vmatpush.msra.mxu0 %v686
  %713 = vmatpush.msra.mxu0 %v685
  %714 = vmatmul.f32.gmra.mxu0 %v696
  %v715 = vpop.f32.mrf.mxu0
  %v716 = vadd.f32 %v694, %v715
  %717 = vdwg.mxu0
  %v718 = vxor.u32 %v716, 2147483648
  %v719 = vmul.f32 %v718, 1.442695
  %v720 = vpow.pop %v719
  %v721 = vadd.f32 %v720, 1.0
  %v722 = vrcp.pop %v721
  %v723 = vmul.f32 %v721, %v722
  %v724 = vsub.f32 1.0, %v723
  %v725 = vmul.f32 %v722, %v724
  %v726 = vadd.f32 %v722, %v725
  %vm727 = vweird.f32 %v721
  %vm728 = vweird.f32 %v722
  %vm729 = vmor %vm727, %vm728
  %v730 = vsel %vm729, %v722, %v726
  %v731 = vand.u32 2147483647, %v721
  %vm732 = vcmp.eq.f32.partialorder %v731, 8.507059e+37
  %v733 = vand.u32 %v721, 2147483648
  %v734 = vor.u32 1.1754944e-38, %v733
  %v735 = vsel %vm732, %v734, %v730
  %v736 = vmul.f32 1.0, %v735
  %v737 = vmul.f32 %v716, %v736
  %v738 = vld [vmem:[%s2 + $0x188] sm:$0xff]
  %v739 = vld [vmem:[%s2 + $0x190] sm:$0xff]
  %v740 = vld [vmem:[%s3 + $0x3] sm:$0x1]
  %v741 = vperm.slane %v740, 0
  %vm742 = vcmask 130048
  %v744 = vsel %vm742, %v737, 0
  %746 = vmatpush.msra.mxu0 0.0
  %747 = vmatpush.msra.mxu0 0.0
  %748 = vmatpush.msra.mxu0 0.0
  %749 = vmatpush.msra.mxu0 0.0
  %750 = vmatpush.msra.mxu0 0.0
  %751 = vmatpush.msra.mxu0 0.0
  %752 = vmatpush.msra.mxu0 0.0
  %753 = vmatpush.msra.mxu0 0.0
  %754 = vmatpush.msra.mxu0 0.0
  %755 = vmatpush.msra.mxu0 0.0
  %756 = vmatpush.msra.mxu0 0.0
  %757 = vmatpush.msra.mxu0 0.0
  %758 = vmatpush.msra.mxu0 0.0
  %759 = vmatpush.msra.mxu0 0.0
  %760 = vmatpush.msra.mxu0 %v739
  %761 = vmatpush.msra.mxu0 %v738
  %762 = vmatmul.f32.gmra.mxu0 %v744
  %v763 = vpop.f32.mrf.mxu0
  %v764 = vadd.f32 %v741, %v763
  %765 = vdwg.mxu0
  %v766 = vld [vmem:[%s1] sm:$0x3]
  %v767 = vld [vmem:[%s2 + $0x198] sm:$0xf]
  %v768 = vld [vmem:[%s3 + $0x4] sm:$0x1]
  %v769 = vperm.slane %v768, 0
  %vm770 = vcmask 31744
  %v772 = vsel %vm770, %v766, 0
  %v775 = vsel %vm89, %v767, 0
  %777 = vmatpush.msra.mxu0 0.0
  %778 = vmatpush.msra.mxu0 0.0
  %779 = vmatpush.msra.mxu0 0.0
  %780 = vmatpush.msra.mxu0 0.0
  %781 = vmatpush.msra.mxu0 0.0
  %782 = vmatpush.msra.mxu0 0.0
  %783 = vmatpush.msra.mxu0 0.0
  %784 = vmatpush.msra.mxu0 0.0
  %785 = vmatpush.msra.mxu0 0.0
  %786 = vmatpush.msra.mxu0 0.0
  %787 = vmatpush.msra.mxu0 0.0
  %788 = vmatpush.msra.mxu0 0.0
  %789 = vmatpush.msra.mxu0 0.0
  %790 = vmatpush.msra.mxu0 0.0
  %791 = vmatpush.msra.mxu0 0.0
  %792 = vmatpush.msra.mxu0 %v775
  %793 = vmatmul.f32.gmra.mxu0 %v772
  %v794 = vpop.f32.mrf.mxu0
  %v795 = vadd.f32 %v769, %v794
  %796 = vdwg.mxu0
  %v797 = vxor.u32 %v795, 2147483648
  %v798 = vmul.f32 %v797, 1.442695
  %v799 = vpow.pop %v798
  %v800 = vadd.f32 %v799, 1.0
  %v801 = vrcp.pop %v800
  %v802 = vmul.f32 %v800, %v801
  %v803 = vsub.f32 1.0, %v802
  %v804 = vmul.f32 %v801, %v803
  %v805 = vadd.f32 %v801, %v804
  %vm806 = vweird.f32 %v800
  %vm807 = vweird.f32 %v801
  %vm808 = vmor %vm806, %vm807
  %v809 = vsel %vm808, %v801, %v805
  %v810 = vand.u32 2147483647, %v800
  %vm811 = vcmp.eq.f32.partialorder %v810, 8.507059e+37
  %v812 = vand.u32 %v800, 2147483648
  %v813 = vor.u32 1.1754944e-38, %v812
  %v814 = vsel %vm811, %v813, %v809
  %v815 = vmul.f32 1.0, %v814
  %v816 = vmul.f32 %v795, %v815
  %v817 = vld [vmem:[%s2 + $0x1a0] sm:$0xff]
  %v818 = vld [vmem:[%s3 + $0x5] sm:$0x1]
  %v819 = vperm.slane %v818, 0
  %vm820 = vcmask 64512
  %v822 = vsel %vm820, %v816, 0
  %824 = vmatpush.msra.mxu0 0.0
  %825 = vmatpush.msra.mxu0 0.0
  %826 = vmatpush.msra.mxu0 0.0
  %827 = vmatpush.msra.mxu0 0.0
  %828 = vmatpush.msra.mxu0 0.0
  %829 = vmatpush.msra.mxu0 0.0
  %830 = vmatpush.msra.mxu0 0.0
  %831 = vmatpush.msra.mxu0 0.0
  %832 = vmatpush.msra.mxu0 0.0
  %833 = vmatpush.msra.mxu0 0.0
  %834 = vmatpush.msra.mxu0 0.0
  %835 = vmatpush.msra.mxu0 0.0
  %836 = vmatpush.msra.mxu0 0.0
  %837 = vmatpush.msra.mxu0 0.0
  %838 = vmatpush.msra.mxu0 0.0
  %839 = vmatpush.msra.mxu0 %v817
  %840 = vmatmul.f32.gmra.mxu0 %v822
  %v841 = vpop.f32.mrf.mxu0
  %v842 = vadd.f32 %v819, %v841
  %843 = vdwg.mxu0
  %v844 = vld [vmem:[%s2 + $0x1a8] sm:$0xf]
  %v845 = vld [vmem:[%s2 + $0x1b0] sm:$0xf]
  %v847 = vsel %vm770, %v842, 0
  %v850 = vsel %vm89, %v845, 0
  %852 = vmatpush.msra.mxu0 0.0
  %853 = vmatpush.msra.mxu0 0.0
  %854 = vmatpush.msra.mxu0 0.0
  %855 = vmatpush.msra.mxu0 0.0
  %856 = vmatpush.msra.mxu0 0.0
  %857 = vmatpush.msra.mxu0 0.0
  %858 = vmatpush.msra.mxu0 0.0
  %859 = vmatpush.msra.mxu0 0.0
  %860 = vmatpush.msra.mxu0 0.0
  %861 = vmatpush.msra.mxu0 0.0
  %862 = vmatpush.msra.mxu0 0.0
  %863 = vmatpush.msra.mxu0 0.0
  %864 = vmatpush.msra.mxu0 0.0
  %865 = vmatpush.msra.mxu0 0.0
  %866 = vmatpush.msra.mxu0 0.0
  %867 = vmatpush.msra.mxu0 %v850
  %868 = vmatmul.f32.gmra.mxu0 %v847
  %v869 = vpop.f32.mrf.mxu0
  %v870 = vadd.f32 0.0, %v869
  %871 = vdwg.mxu0
  %v873 = vsel %vm770, %v764, 0
  %v876 = vsel %vm89, %v844, 0
  %878 = vmatpush.msra.mxu0 0.0
  %879 = vmatpush.msra.mxu0 0.0
  %880 = vmatpush.msra.mxu0 0.0
  %881 = vmatpush.msra.mxu0 0.0
  %882 = vmatpush.msra.mxu0 0.0
  %883 = vmatpush.msra.mxu0 0.0
  %884 = vmatpush.msra.mxu0 0.0
  %885 = vmatpush.msra.mxu0 0.0
  %886 = vmatpush.msra.mxu0 0.0
  %887 = vmatpush.msra.mxu0 0.0
  %888 = vmatpush.msra.mxu0 0.0
  %889 = vmatpush.msra.mxu0 0.0
  %890 = vmatpush.msra.mxu0 0.0
  %891 = vmatpush.msra.mxu0 0.0
  %892 = vmatpush.msra.mxu0 0.0
  %893 = vmatpush.msra.mxu0 %v876
  %894 = vmatmul.f32.gmra.mxu0 %v873
  %v895 = vpop.f32.mrf.mxu0
  %v896 = vadd.f32 %v870, %v895
  %897 = vdwg.mxu0
  %v898 = vld [vmem:[%s3 + $0x6] sm:$0x1]
  %v899 = vperm.slane %v898, 0
  %v900 = vadd.f32 %v896, %v899
  %v901 = vxor.u32 %v900, 2147483648
  %v902 = vmul.f32 %v901, 1.442695
  %v903 = vpow.pop %v902
  %v904 = vadd.f32 %v903, 1.0
  %v905 = vrcp.pop %v904
  %v906 = vmul.f32 %v904, %v905
  %v907 = vsub.f32 1.0, %v906
  %v908 = vmul.f32 %v905, %v907
  %v909 = vadd.f32 %v905, %v908
  %vm910 = vweird.f32 %v904
  %vm911 = vweird.f32 %v905
  %vm912 = vmor %vm910, %vm911
  %v913 = vsel %vm912, %v905, %v909
  %v914 = vand.u32 2147483647, %v904
  %vm915 = vcmp.eq.f32.partialorder %v914, 8.507059e+37
  %v916 = vand.u32 %v904, 2147483648
  %v917 = vor.u32 1.1754944e-38, %v916
  %v918 = vsel %vm915, %v917, %v913
  %v919 = vmul.f32 1.0, %v918
  %v920 = vmul.f32 %v900, %v919
  %v921 = vld [vmem:[%s2 + $0x1b8] sm:$0xff]
  %v922 = vld [vmem:[%s2 + $0x1c0] sm:$0xff]
  %v923 = vld [vmem:[%s3 + $0x7] sm:$0x1]
  %v924 = vperm.slane %v923, 0
  %v926 = vsel %vm742, %v920, 0
  %928 = vmatpush.msra.mxu0 0.0
  %929 = vmatpush.msra.mxu0 0.0
  %930 = vmatpush.msra.mxu0 0.0
  %931 = vmatpush.msra.mxu0 0.0
  %932 = vmatpush.msra.mxu0 0.0
  %933 = vmatpush.msra.mxu0 0.0
  %934 = vmatpush.msra.mxu0 0.0
  %935 = vmatpush.msra.mxu0 0.0
  %936 = vmatpush.msra.mxu0 0.0
  %937 = vmatpush.msra.mxu0 0.0
  %938 = vmatpush.msra.mxu0 0.0
  %939 = vmatpush.msra.mxu0 0.0
  %940 = vmatpush.msra.mxu0 0.0
  %941 = vmatpush.msra.mxu0 0.0
  %942 = vmatpush.msra.mxu0 %v922
  %943 = vmatpush.msra.mxu0 %v921
  %944 = vmatmul.f32.gmra.mxu0 %v926
  %v945 = vpop.f32.mrf.mxu0
  %v946 = vadd.f32 %v924, %v945
  %947 = vdwg.mxu0
  %v948 = vxor.u32 %v946, 2147483648
  %v949 = vmul.f32 %v948, 1.442695
  %v950 = vpow.pop %v949
  %v951 = vadd.f32 %v950, 1.0
  %v952 = vrcp.pop %v951
  %v953 = vmul.f32 %v951, %v952
  %v954 = vsub.f32 1.0, %v953
  %v955 = vmul.f32 %v952, %v954
  %v956 = vadd.f32 %v952, %v955
  %vm957 = vweird.f32 %v951
  %vm958 = vweird.f32 %v952
  %vm959 = vmor %vm957, %vm958
  %v960 = vsel %vm959, %v952, %v956
  %v961 = vand.u32 2147483647, %v951
  %vm962 = vcmp.eq.f32.partialorder %v961, 8.507059e+37
  %v963 = vand.u32 %v951, 2147483648
  %v964 = vor.u32 1.1754944e-38, %v963
  %v965 = vsel %vm962, %v964, %v960
  %v966 = vmul.f32 1.0, %v965
  %v967 = vmul.f32 %v946, %v966
  %v968 = vld [vmem:[%s2 + $0x1c8] sm:$0xff]
  %v969 = vld [vmem:[%s2 + $0x1d0] sm:$0xff]
  %v970 = vld [vmem:[%s3 + $0x8] sm:$0x1]
  %v971 = vperm.slane %v970, 0
  %v973 = vsel %vm742, %v967, 0
  %975 = vmatpush.msra.mxu0 0.0
  %976 = vmatpush.msra.mxu0 0.0
  %977 = vmatpush.msra.mxu0 0.0
  %978 = vmatpush.msra.mxu0 0.0
  %979 = vmatpush.msra.mxu0 0.0
  %980 = vmatpush.msra.mxu0 0.0
  %981 = vmatpush.msra.mxu0 0.0
  %982 = vmatpush.msra.mxu0 0.0
  %983 = vmatpush.msra.mxu0 0.0
  %984 = vmatpush.msra.mxu0 0.0
  %985 = vmatpush.msra.mxu0 0.0
  %986 = vmatpush.msra.mxu0 0.0
  %987 = vmatpush.msra.mxu0 0.0
  %988 = vmatpush.msra.mxu0 0.0
  %989 = vmatpush.msra.mxu0 %v969
  %990 = vmatpush.msra.mxu0 %v968
  %991 = vmatmul.f32.gmra.mxu0 %v973
  %v992 = vpop.f32.mrf.mxu0
  %v993 = vadd.f32 %v971, %v992
  %994 = vdwg.mxu0
  %vm995 = vcmask 1024
  %996 = vst.msk [vmem:[%s4] sm:$0x3] %vm995, %v993
  // Predicated region
  $region18: #{ny_network_forward.1} parent=0 // pred_check
    _
  $region19: #{ny_network_forward.1} parent=0 // pred_check_branch
    %998 = sbr.rel (0) target = $region21
  $region20: #{ny_network_forward.1} parent=0 // pred_region
    _
  $region21: #{ny_network_forward.1} parent=0 // pred_fallthru
    _
  // Predicated region
  $region22: #{ny_network_forward.1} parent=0 // pred_check
    _
  $region23: #{ny_network_forward.1} parent=0 // pred_check_branch
    %1000 = sbr.rel (0) target = $region25
  $region24: #{ny_network_forward.1} parent=0 // pred_region
    _
  $region25: #{ny_network_forward.1} parent=0 // pred_fallthru
    _

</llo_original>
